<compile_context>
chip_gen: v5e
topology: v5e:2x2
jax: 0.10.0
libtpu: 0.0.40
codegen_flags: <defaults>
</compile_context>

<pallas_src>
import jax
import jax.numpy as jnp
import numpy as np
from jax.experimental import pallas as pl
from jax.experimental.pallas import tpu as pltpu

EPS = 1e-5


def _pick_tile(nrows):
    for tm in (256, 128, 64, 32, 16, 8):
        if nrows % tm == 0:
            return tm
    return nrows


# ---------- pass 1: conv matmul + per-column sum / sum-of-squares ----------
def _stats_kernel(x_ref, w_ref, sum_ref, sq_ref):
    @pl.when(pl.program_id(0) == 0)
    def _init():
        sum_ref[...] = jnp.zeros_like(sum_ref)
        sq_ref[...] = jnp.zeros_like(sq_ref)

    y = jnp.dot(x_ref[...], w_ref[...], preferred_element_type=jnp.float32)
    sum_ref[...] = sum_ref[...] + jnp.sum(y, axis=0, keepdims=True)
    sq_ref[...] = sq_ref[...] + jnp.sum(y * y, axis=0, keepdims=True)


# ---------- pass 2: folded conv+BN matmul, lane-dense output ----------
def _fused_kernel(x_ref, w_ref, shift_ref, o_ref):
    y = jnp.dot(x_ref[...], w_ref[...], preferred_element_type=jnp.float32)
    o_ref[...] = (y + shift_ref[...]).astype(o_ref.dtype)


def deconv2d_batchnorm(x_nchw, w_pt, conv_bias, gamma, beta, *, stride, padding):
    """Forward of deconv2DBatchNorm (train-mode BN over batch statistics).

    x_nchw: (N, Cin, H, W)          w_pt: (Cin, Cout, k, k)  (PyTorch layout)
    conv_bias / gamma / beta: (Cout,)
    Supported: stride == k_size and padding == 0.
    """
    N, Cin, H, W = x_nchw.shape
    Cin_w, Cout, KH, KW = w_pt.shape
    assert Cin_w == Cin
    # TODO(synk): stride < k_size or padding > 0 makes kernel taps overlap in the
    # output; that needs an accumulating scatter and is not implemented here.
    assert KH == KW == stride and padding == 0, "only stride == k_size, padding == 0"

    KK = KH * KW
    KKC = KK * Cout
    NHW = N * H * W
    TM = _pick_tile(NHW)
    grid = (NHW // TM,)

    # NHWC rows; bf16 activations/weights feed the MXU, accumulation in f32.
    x_rows = jnp.transpose(x_nchw, (0, 2, 3, 1)).reshape(NHW, Cin)
    x_bf16 = x_rows.astype(jnp.bfloat16)
    # w_flat[ci, (di*KW + dj)*Cout + co] = w_pt[ci, co, di, dj]
    w_flat = jnp.transpose(w_pt, (0, 2, 3, 1)).reshape(Cin, KKC)
    w_bf16 = w_flat.astype(jnp.bfloat16)

    # ---- pass 1: per-(di,dj,co) column sum and sum-of-squares ----
    col_sum, col_sq = pl.pallas_call(
        _stats_kernel,
        out_shape=(jax.ShapeDtypeStruct((1, KKC), jnp.float32),
                   jax.ShapeDtypeStruct((1, KKC), jnp.float32)),
        grid=grid,
        in_specs=[pl.BlockSpec((TM, Cin), lambda i: (i, 0)),
                  pl.BlockSpec((Cin, KKC), lambda i: (0, 0))],
        out_specs=(pl.BlockSpec((1, KKC), lambda i: (0, 0)),
                   pl.BlockSpec((1, KKC), lambda i: (0, 0))),
        compiler_params=pltpu.CompilerParams(
            dimension_semantics=("arbitrary",)),        # reduction axis
    )(x_bf16, w_bf16)

    # ---- fold BatchNorm (batch stats) into the conv weights: O(C^2) work ----
    count = float(NHW * KK)                              # = N * H_out * W_out
    raw_mean = col_sum.reshape(KK, Cout).sum(0) / count  # stats of x@W (no bias)
    raw_sq = col_sq.reshape(KK, Cout).sum(0) / count
    mean = raw_mean + conv_bias                          # conv bias shifts the mean only
    var = jnp.maximum(raw_sq - raw_mean * raw_mean, 0.0) # clamp: no NaN through rsqrt
    scale = gamma * jax.lax.rsqrt(var + EPS)             # (Cout,)
    shift = beta + (conv_bias - mean) * scale            # (Cout,)
    w_scaled = (w_flat * jnp.tile(scale, KK)[None, :]).astype(jnp.bfloat16)
    shift_row = jnp.tile(shift, KK)[None, :].astype(jnp.float32)   # (1, KKC)

    # ---- pass 2: y = x @ (W * scale) + shift, lane-dense (TM, KKC) output ----
    y_sub = pl.pallas_call(
        _fused_kernel,
        out_shape=jax.ShapeDtypeStruct((NHW, KKC), jnp.float32),
        grid=grid,
        in_specs=[pl.BlockSpec((TM, Cin), lambda i: (i, 0)),
                  pl.BlockSpec((Cin, KKC), lambda i: (0, 0)),
                  pl.BlockSpec((1, KKC), lambda i: (0, 0))],
        out_specs=pl.BlockSpec((TM, KKC), lambda i: (i, 0)),
        compiler_params=pltpu.CompilerParams(
            dimension_semantics=("parallel",)),          # megacore split on v7x
    )(x_bf16, w_scaled, shift_row)

    # depth-to-space (pure layout) and back to NCHW.
    y = y_sub.reshape(N, H, W, KH, KW, Cout)
    y = jnp.transpose(y, (0, 1, 3, 2, 4, 5)).reshape(N, H * KH, W * KW, Cout)
    return jnp.transpose(y, (0, 3, 1, 2))


# ------------------------- pure-JAX reference -------------------------
def reference(x_nchw, w_pt, conv_bias, gamma, beta, *, stride, padding):
    x = jnp.transpose(x_nchw, (0, 2, 3, 1)).astype(jnp.float32)
    Cin, Cout, KH, KW = w_pt.shape
    # ConvTranspose2d == lhs-dilated correlation with the spatially flipped kernel.
    w_hwio = jnp.transpose(w_pt, (2, 3, 0, 1))[::-1, ::-1, :, :]   # (kH,kW,Cin,Cout)
    pad = KH - 1 - padding
    y = jax.lax.conv_general_dilated(
        x, w_hwio, window_strides=(1, 1),
        padding=[(pad, pad), (pad, pad)],
        lhs_dilation=(stride, stride),
        dimension_numbers=('NHWC', 'HWIO', 'NHWC'))
    y = y + conv_bias[None, None, None, :]
    m = jnp.mean(y, axis=(0, 1, 2), keepdims=True)
    v = jnp.mean((y - m) ** 2, axis=(0, 1, 2), keepdims=True)      # biased variance
    y = (y - m) * (gamma[None, None, None, :] * jax.lax.rsqrt(v + EPS)) \
        + beta[None, None, None, :]
    return jnp.transpose(y, (0, 3, 1, 2))


if __name__ == "__main__":
    # deconv2DBatchNorm(in_channels=128, n_filters=32, k_size=2, stride=2,
    #                   padding=0, bias=True)
    N, Cin, H, W = 2, 128, 16, 16
    Cout, K, S, P = 32, 2, 2, 0

    key = jax.random.PRNGKey(0)
    ks = jax.random.split(key, 5)
    x = jax.random.normal(ks[0], (N, Cin, H, W), jnp.float32)
    w = jax.random.normal(ks[1], (Cin, Cout, K, K), jnp.float32) * 0.1
    bias = 0.1 * jax.random.normal(ks[2], (Cout,), jnp.float32)
    # BatchNorm affine params (PyTorch default gamma=1, beta=0; randomized to
    # exercise the math).
    gamma = 1.0 + 0.1 * jax.random.normal(ks[3], (Cout,), jnp.float32)
    beta = 0.1 * jax.random.normal(ks[4], (Cout,), jnp.float32)

    out = jax.block_until_ready(
        deconv2d_batchnorm(x, w, bias, gamma, beta, stride=S, padding=P))
    ref = jax.block_until_ready(
        reference(x, w, bias, gamma, beta, stride=S, padding=P))

    # Tolerance reflects bf16 MXU inputs (f32 accumulation) vs. an f32 reference.
    np.testing.assert_allclose(np.asarray(out), np.asarray(ref),
                               rtol=2e-2, atol=3e-2)
    print("KERNEL_OK")
</pallas_src>

<mosaic_0001>
module attributes {stable_mosaic.version = 11 : i64} {
  func.func @_stats_kernel(%arg0: i32, %arg1: memref<256x128xbf16, #tpu.memory_space<vmem>>, %arg2: memref<128x128xbf16, #tpu.memory_space<vmem>>, %arg3: memref<1x128xf32, #tpu.memory_space<vmem>>, %arg4: memref<1x128xf32, #tpu.memory_space<vmem>>) attributes {dimension_semantics = [#tpu.dimension_semantics<arbitrary>], iteration_bounds = array<i64: 2>, scalar_prefetch = 0 : i64, scratch_operands = 0 : i64, tpu.core_type = #tpu.core_type<tc>, window_params = [{transform_indices = @transform_0, window_bounds = array<i64: 256, 128>}, {pipeline_mode = #tpu.pipeline_mode<synchronous>, transform_indices = @transform_1, window_bounds = array<i64: 128, 128>}, {pipeline_mode = #tpu.pipeline_mode<synchronous>, transform_indices = @transform_2, window_bounds = array<i64: 1, 128>}, {pipeline_mode = #tpu.pipeline_mode<synchronous>, transform_indices = @transform_3, window_bounds = array<i64: 1, 128>}]} {
    %c0_i32 = arith.constant 0 : i32
    %0 = arith.cmpi eq, %arg0, %c0_i32 : i32
    %1 = arith.extui %0 : i1 to i32
    %c0_i32_0 = arith.constant 0 : i32
    %2 = arith.cmpi ne, %1, %c0_i32_0 : i32
    scf.if %2 {
      %cst_14 = arith.constant 0.000000e+00 : f32
      %17 = vector.broadcast %cst_14 : f32 to vector<1x128xf32>
      %c0_15 = arith.constant 0 : index
      %c0_16 = arith.constant 0 : index
      %18 = vector.load %arg3[%c0_15, %c0_16] : memref<1x128xf32, #tpu.memory_space<vmem>>, vector<1x128xf32>
      tpu.vector_store %arg3[%c0_15, %c0_16], %17 {strides = array<i32>} : memref<1x128xf32, #tpu.memory_space<vmem>>, vector<1x128xf32>,
      %cst_17 = arith.constant 0.000000e+00 : f32
      %19 = vector.broadcast %cst_17 : f32 to vector<1x128xf32>
      %c0_18 = arith.constant 0 : index
      %c0_19 = arith.constant 0 : index
      %20 = vector.load %arg4[%c0_18, %c0_19] : memref<1x128xf32, #tpu.memory_space<vmem>>, vector<1x128xf32>
      tpu.vector_store %arg4[%c0_18, %c0_19], %19 {strides = array<i32>} : memref<1x128xf32, #tpu.memory_space<vmem>>, vector<1x128xf32>,
    } else {
    }
    %c0 = arith.constant 0 : index
    %c0_1 = arith.constant 0 : index
    %3 = vector.load %arg1[%c0, %c0_1] : memref<256x128xbf16, #tpu.memory_space<vmem>>, vector<256x128xbf16>
    %c0_2 = arith.constant 0 : index
    %c0_3 = arith.constant 0 : index
    %4 = vector.load %arg2[%c0_2, %c0_3] : memref<128x128xbf16, #tpu.memory_space<vmem>>, vector<128x128xbf16>
    %cst = arith.constant dense<0.000000e+00> : vector<256x128xf32>
    %5 = tpu.matmul %3, %4, %cst {dimension_numbers = #tpu.dot_dimension_numbers<[1], [0], [0], [1], [0, 0, 1, 1], [], []>} : vector<256x128xbf16>, vector<128x128xbf16>, vector<256x128xf32> -> vector<256x128xf32>
    %c0_4 = arith.constant 0 : index
    %c0_5 = arith.constant 0 : index
    %6 = vector.load %arg3[%c0_4, %c0_5] : memref<1x128xf32, #tpu.memory_space<vmem>>, vector<1x128xf32>
    %cst_6 = arith.constant dense<0.000000e+00> : vector<128xf32>
    %7 = vector.multi_reduction <add>, %5, %cst_6 [0] : vector<256x128xf32> to vector<128xf32>
    %8 = vector.shape_cast %7 : vector<128xf32> to vector<1x128xf32>
    %9 = arith.addf %6, %8 : vector<1x128xf32>
    %c0_7 = arith.constant 0 : index
    %c0_8 = arith.constant 0 : index
    %10 = vector.load %arg3[%c0_7, %c0_8] : memref<1x128xf32, #tpu.memory_space<vmem>>, vector<1x128xf32>
    tpu.vector_store %arg3[%c0_7, %c0_8], %9 {strides = array<i32>} : memref<1x128xf32, #tpu.memory_space<vmem>>, vector<1x128xf32>,
    %c0_9 = arith.constant 0 : index
    %c0_10 = arith.constant 0 : index
    %11 = vector.load %arg4[%c0_9, %c0_10] : memref<1x128xf32, #tpu.memory_space<vmem>>, vector<1x128xf32>
    %12 = arith.mulf %5, %5 : vector<256x128xf32>
    %cst_11 = arith.constant dense<0.000000e+00> : vector<128xf32>
    %13 = vector.multi_reduction <add>, %12, %cst_11 [0] : vector<256x128xf32> to vector<128xf32>
    %14 = vector.shape_cast %13 : vector<128xf32> to vector<1x128xf32>
    %15 = arith.addf %11, %14 : vector<1x128xf32>
    %c0_12 = arith.constant 0 : index
    %c0_13 = arith.constant 0 : index
    %16 = vector.load %arg4[%c0_12, %c0_13] : memref<1x128xf32, #tpu.memory_space<vmem>>, vector<1x128xf32>
    tpu.vector_store %arg4[%c0_12, %c0_13], %15 {strides = array<i32>} : memref<1x128xf32, #tpu.memory_space<vmem>>, vector<1x128xf32>,
    return
  }
  func.func @transform_0(%arg0: i32) -> (i32, i32) {
    %c0_i32 = arith.constant 0 : i32
    %c0_i32_0 = arith.constant 0 : i32
    return %arg0, %c0_i32 : i32, i32
  }
  func.func @transform_1(%arg0: i32) -> (i32, i32) {
    %c0_i32 = arith.constant 0 : i32
    %c0_i32_0 = arith.constant 0 : i32
    %c0_i32_1 = arith.constant 0 : i32
    return %c0_i32, %c0_i32_0 : i32, i32
  }
  func.func @transform_2(%arg0: i32) -> (i32, i32) {
    %c0_i32 = arith.constant 0 : i32
    %c0_i32_0 = arith.constant 0 : i32
    %c0_i32_1 = arith.constant 0 : i32
    return %c0_i32, %c0_i32_0 : i32, i32
  }
  func.func @transform_3(%arg0: i32) -> (i32, i32) {
    %c0_i32 = arith.constant 0 : i32
    %c0_i32_0 = arith.constant 0 : i32
    %c0_i32_1 = arith.constant 0 : i32
    return %c0_i32, %c0_i32_0 : i32, i32
  }
}

</mosaic_0001>

<llo_original>
// kernel: tpu_custom_call.1
$region0: #{tpu_custom_call.1}
  #allocation0 [shape = 'u32[]', space=smem, size = 0x4, offset = 0x4, fixed_abs, tag = 'smem constant byte address 0x4 - core index']
  #allocation1 [shape = 'u32[72,128]{1,0:T(1,128)}', space=vmem, size = 0x9000, scoped, tag = 'internal scratch']
  %s0 = inlined_call_operand.hbm [shape: bf16[512,128], index: 0, kind: input, shape index: {}]
  %s1 = inlined_call_operand.hbm [shape: bf16[128,128], index: 1, kind: input, shape index: {}]
  %s2 = inlined_call_operand.hbm [shape: f32[1,128], index: 2, kind: output, shape index: {0}]
  %s3 = inlined_call_operand.hbm [shape: f32[1,128], index: 3, kind: output, shape index: {1}]
  %4 = xla_tuple %s2, %s3
  %s5 = sld [smem:[#allocation0]]
  $region61: #{tpu_custom_call.1} parent=0
    _
  %s7 = ssub.s32 1, %s5
  %s8 = scalar_select 0, %s7, %s5
  $region1: #{tpu_custom_call.1} parent=0
    #allocation2 [shape = 'u8[131072]{0}', space=vmem, size = 0x20000, scoped, tag = 'input window, operand 0']
    #allocation3 [shape = 's32[2]{0}', space=sflag, size = 0x8, scoped, tag = 'scoped memory for tpu_custom_call.1']
    #allocation4 [shape = 's32[2]{0}', space=sflag, size = 0x8, scoped, tag = 'scoped memory for tpu_custom_call.1']
    #allocation5 [shape = 'u8[32768]{0}', space=vmem, size = 0x8000, scoped, tag = 'input window, operand 1, single buffered']
    #allocation6 [shape = 's32[1]{0}', space=sflag, size = 0x4, scoped, tag = 'scoped memory for tpu_custom_call.1']
    #allocation7 [shape = 'u8[512]{0}', space=vmem, size = 0x400, scoped, tag = 'output window, operand 0, single buffered']
    #allocation8 [shape = 'u8[512]{0}', space=vmem, size = 0x400, scoped, tag = 'output window, operand 1, single buffered']
    #allocation9 [shape = 's32[1]{0}', space=sflag, size = 0x4, scoped, tag = 'scoped memory for tpu_custom_call.1']
    %9 = vsyncpa [#allocation3], 0
    %s10 = scalar_lea.sflag [#allocation3], 1
    %11 = vsyncpa %s10, 0
    %12 = vsyncpa [#allocation6], 0
    %13 = vsyncpa [#allocation4], 0
    %14 = vsyncpa [#allocation9], 0
    loop: start=0, step=1, limit=4
    $region2: #{tpu_custom_call.1} parent=1 // loop_pre_header
      _
    $region3: #{tpu_custom_call.1} parent=1 // loop_header
      %s16 = sphi 0, %s20
      %p17 = scmp.ge.s32.totalorder %s16, 4
      %s26 = sphi 0, %s28
      %s29 = sphi 0, %s26
      %s30 = sphi 0, %s29
      %s46 = sphi 0, %s30
      %s50 = sphi 0, %s50
      %s52 = sphi 0, %s50
      %s53 = sphi 0, %s52
      %s67 = sphi 0, %s53
      %s71 = sphi 0, %s71
      %s73 = sphi 0, %s71
      %s74 = sphi 0, %s73
      %s88 = sphi 0, %s74
      %s92 = sphi 0, %s92
      %s94 = sphi 0, %s92
      %s95 = sphi 0, %s94
      %s109 = sphi 0, %s95
    $region4: #{tpu_custom_call.1} parent=1 // loop_header_branch
      %19 = sbr.rel (%p17) target = $region8
    $region5: #{tpu_custom_call.1} parent=1 // loop_body
      %s21 = ssub.s32 %s16, 1
      %s22 = ssub.s32 %s16, 2
      %s23 = sadd.s32 %s16, 1
      %s24 = ssub.s32 %s16, %s23
      %p25 = scmp.eq.s32.totalorder %s24, 0
      %s27 = sadd.s32 %s26, 1
      %s28 = scalar_select %p25, %s26, %s27
      %p31 = pneg %p25
      %p32 = scmp.eq.s32.totalorder %s16, 1
      %p33 = por %p31, %p32
      %p34 = scmp.ne.s32.totalorder %s26, %s29
      %p35 = scmp.eq.s32.totalorder %s16, 0
      %p36 = por %p34, %p35
      %p37 = scmp.ne.s32.totalorder %s26, %s29
      %p38 = scmp.eq.s32.totalorder %s21, 1
      %p39 = por %p37, %p38
      %p40 = scmp.ne.s32.totalorder %s29, %s30
      %p41 = scmp.eq.s32.totalorder %s21, 0
      %p42 = por %p40, %p41
      %p43 = scmp.ne.s32.totalorder %s29, %s30
      %p44 = scmp.eq.s32.totalorder %s22, 1
      %p45 = por %p43, %p44
      %p47 = scmp.ne.s32.totalorder %s30, %s46
      %p48 = scmp.eq.s32.totalorder %s22, 0
      %p49 = por %p47, %p48
      %s51 = sadd.s32 %s50, 1
      %p54 = scmp.eq.s32.totalorder %s16, 1
      %p55 = scmp.ne.s32.totalorder %s50, %s52
      %p56 = scmp.eq.s32.totalorder %s16, 0
      %p57 = por %p55, %p56
      %p58 = scmp.ne.s32.totalorder %s50, %s52
      %p59 = scmp.eq.s32.totalorder %s21, 1
      %p60 = por %p58, %p59
      %p61 = scmp.ne.s32.totalorder %s52, %s53
      %p62 = scmp.eq.s32.totalorder %s21, 0
      %p63 = por %p61, %p62
      %p64 = scmp.ne.s32.totalorder %s52, %s53
      %p65 = scmp.eq.s32.totalorder %s22, 1
      %p66 = por %p64, %p65
      %p68 = scmp.ne.s32.totalorder %s53, %s67
      %p69 = scmp.eq.s32.totalorder %s22, 0
      %p70 = por %p68, %p69
      %s72 = sadd.s32 %s71, 1
      %p75 = scmp.eq.s32.totalorder %s16, 1
      %p76 = scmp.ne.s32.totalorder %s71, %s73
      %p77 = scmp.eq.s32.totalorder %s16, 0
      %p78 = por %p76, %p77
      %p79 = scmp.ne.s32.totalorder %s71, %s73
      %p80 = scmp.eq.s32.totalorder %s21, 1
      %p81 = por %p79, %p80
      %p82 = scmp.ne.s32.totalorder %s73, %s74
      %p83 = scmp.eq.s32.totalorder %s21, 0
      %p84 = por %p82, %p83
      %p85 = scmp.ne.s32.totalorder %s73, %s74
      %p86 = scmp.eq.s32.totalorder %s22, 1
      %p87 = por %p85, %p86
      %p89 = scmp.ne.s32.totalorder %s74, %s88
      %p90 = scmp.eq.s32.totalorder %s22, 0
      %p91 = por %p89, %p90
      %s93 = sadd.s32 %s92, 1
      %p96 = scmp.eq.s32.totalorder %s16, 1
      %p97 = scmp.ne.s32.totalorder %s92, %s94
      %p98 = scmp.eq.s32.totalorder %s16, 0
      %p99 = por %p97, %p98
      %p100 = scmp.ne.s32.totalorder %s92, %s94
      %p101 = scmp.eq.s32.totalorder %s21, 1
      %p102 = por %p100, %p101
      %p103 = scmp.ne.s32.totalorder %s94, %s95
      %p104 = scmp.eq.s32.totalorder %s21, 0
      %p105 = por %p103, %p104
      %p106 = scmp.ne.s32.totalorder %s94, %s95
      %p107 = scmp.eq.s32.totalorder %s22, 1
      %p108 = por %p106, %p107
      %p110 = scmp.ne.s32.totalorder %s95, %s109
      %p111 = scmp.eq.s32.totalorder %s22, 0
      %p112 = por %p110, %p111
      %p113 = scmp.le.s32.totalorder 1, %s16
      %p114 = scmp.lt.s32.totalorder %s16, 3
      %p115 = pnand %p113, %p114
      %p116 = pneg %p115
      // Predicated region
      $region9: #{tpu_custom_call.1} parent=5 // pred_check
        _
      $region10: #{tpu_custom_call.1} parent=5 // pred_check_branch
        %118 = sbr.rel (%p115) target = $region12
      $region11: #{tpu_custom_call.1} parent=5 // pred_region
        %s119 = ssub.s32 %s16, 1
        // Predicated region
        $region13: #{tpu_custom_call.1} parent=11 // pred_check
          %p120 = pneg %p63
        $region14: #{tpu_custom_call.1} parent=11 // pred_check_branch
          %122 = sbr.rel (%p120) target = $region16
        $region15: #{tpu_custom_call.1} parent=11 // pred_region
          %124 = vsyncadd [#allocation6], 0
          %s125 = sshll.u32 %s1, 4
          %s126 = int_to_ptr.hbm [resolvable:$true] %s125
          %s127 = sshll.u32 [#allocation5], 4
          %s128 = int_to_ptr.vmem [resolvable:$true] %s127
          %133 = dma.hbm_to_vmem [thread:$0]  %s126, 1024, %s128, [#allocation6], 64, 64, 4
        $region16: #{tpu_custom_call.1} parent=11 // pred_fallthru
          _
      $region12: #{tpu_custom_call.1} parent=5 // pred_fallthru
        _
      %p134 = scmp.lt.s32.totalorder %s16, 2
      // Predicated region
      $region17: #{tpu_custom_call.1} parent=5 // pred_check
        %p135 = pneg %p134
      $region18: #{tpu_custom_call.1} parent=5 // pred_check_branch
        %137 = sbr.rel (%p135) target = $region20
      $region19: #{tpu_custom_call.1} parent=5 // pred_region
        // Predicated region
        $region21: #{tpu_custom_call.1} parent=19 // pred_check
          %p138 = pneg %p36
        $region22: #{tpu_custom_call.1} parent=19 // pred_check_branch
          %140 = sbr.rel (%p138) target = $region24
        $region23: #{tpu_custom_call.1} parent=19 // pred_region
          %s141 = sand.u32 %s26, 1
          %s142 = scalar_lea.sflag [#allocation3], %s141
          %s143 = sand.u32 %s26, 1
          %s144 = smul.addr %s143, 128
          %s145 = scalar_lea.vmem [#allocation2], %s144
          %s146 = smul.u32 32, %s16
          %148 = vsyncadd %s142, 0
          %s149 = smul.addr %s146, 4
          %s150 = scalar_lea.hbm %s0, %s149
          %s151 = sshll.u32 %s150, 4
          %s152 = int_to_ptr.hbm [resolvable:$true] %s151
          %s153 = sshll.u32 %s145, 4
          %s154 = int_to_ptr.vmem [resolvable:$true] %s153
          %159 = dma.hbm_to_vmem [thread:$0]  %s152, 2048, %s154, %s142, 64, 64, 4
        $region24: #{tpu_custom_call.1} parent=19 // pred_fallthru
          _
      $region20: #{tpu_custom_call.1} parent=5 // pred_fallthru
        _
      %p160 = scmp.le.s32.totalorder 1, %s16
      %p161 = scmp.lt.s32.totalorder %s16, 3
      %p162 = pnand %p160, %p161
      %p163 = pneg %p162
      // Predicated region
      $region25: #{tpu_custom_call.1} parent=5 // pred_check
        _
      $region26: #{tpu_custom_call.1} parent=5 // pred_check_branch
        %165 = sbr.rel (%p162) target = $region28
      $region27: #{tpu_custom_call.1} parent=5 // pred_region
        %s166 = ssub.s32 %s16, 1
        %s167 = sand.u32 %s29, 1
        %s168 = scalar_lea.sflag [#allocation3], %s167
        %s169 = sand.u32 %s29, 1
        %s170 = smul.addr %s169, 128
        %s171 = scalar_lea.vmem [#allocation2], %s170
        // Predicated region
        $region29: #{tpu_custom_call.1} parent=27 // pred_check
          %p172 = pneg %p42
        $region30: #{tpu_custom_call.1} parent=27 // pred_check_branch
          %174 = sbr.rel (%p172) target = $region32
        $region31: #{tpu_custom_call.1} parent=27 // pred_region
          %176 = dma.done %s168, 2048
        $region32: #{tpu_custom_call.1} parent=27 // pred_fallthru
          _
        // Predicated region
        $region33: #{tpu_custom_call.1} parent=27 // pred_check
          %p177 = pneg %p63
        $region34: #{tpu_custom_call.1} parent=27 // pred_check_branch
          %179 = sbr.rel (%p177) target = $region36
        $region35: #{tpu_custom_call.1} parent=27 // pred_region
          %181 = dma.done [#allocation6], 1024
        $region36: #{tpu_custom_call.1} parent=27 // pred_fallthru
          _
        %s182 = sand.u32 %s29, 1
        %s183 = scalar_lea.sflag [#allocation3], %s182
        %s184 = sand.u32 %s29, 1
        %s185 = smul.addr %s184, 128
        %s186 = scalar_lea.vmem [#allocation2], %s185
        %p187 = pneg %p42
        %p188 = pneg %p39
        %p189 = pneg %p63
        %p190 = pneg %p60
        %p191 = pneg %p84
        %p192 = pneg %p81
        %p193 = pneg %p105
        %p194 = pneg %p102
        %s195 = smul.u32 32, %s21
        %p196 = scmp.eq.s32.totalorder %s21, 0
        // Predicated region
        $region37: #{tpu_custom_call.1} parent=27 // pred_check
          %p197 = pneg %p196
        $region38: #{tpu_custom_call.1} parent=27 // pred_check_branch
          %199 = sbr.rel (%p197) target = $region40
        $region39: #{tpu_custom_call.1} parent=27 // pred_region
          %200 = vst [vmem:[#allocation7] sm:$0x1] 0.0
          %201 = vst [vmem:[#allocation8] sm:$0x1] 0.0
        $region40: #{tpu_custom_call.1} parent=27 // pred_fallthru
          _
        %v202 = vld [vmem:[%s171] sm:$0xf]
        %v203 = vld [vmem:[%s171 + $0x4] sm:$0xf]
        %v204 = vld [vmem:[%s171 + $0x8] sm:$0xf]
        %v205 = vld [vmem:[%s171 + $0xc] sm:$0xf]
        %v206 = vld [vmem:[%s171 + $0x10] sm:$0xf]
        %v207 = vld [vmem:[%s171 + $0x14] sm:$0xf]
        %v208 = vld [vmem:[%s171 + $0x18] sm:$0xf]
        %v209 = vld [vmem:[%s171 + $0x1c] sm:$0xf]
        %v210 = vld [vmem:[%s171 + $0x20] sm:$0xf]
        %v211 = vld [vmem:[%s171 + $0x24] sm:$0xf]
        %v212 = vld [vmem:[%s171 + $0x28] sm:$0xf]
        %v213 = vld [vmem:[%s171 + $0x2c] sm:$0xf]
        %v214 = vld [vmem:[%s171 + $0x30] sm:$0xf]
        %v215 = vld [vmem:[%s171 + $0x34] sm:$0xf]
        %v216 = vld [vmem:[%s171 + $0x38] sm:$0xf]
        %v217 = vld [vmem:[%s171 + $0x3c] sm:$0xf]
        %v218 = vld [vmem:[%s171 + $0x40] sm:$0xf]
        %v219 = vld [vmem:[%s171 + $0x44] sm:$0xf]
        %v220 = vld [vmem:[%s171 + $0x48] sm:$0xf]
        %v221 = vld [vmem:[%s171 + $0x4c] sm:$0xf]
        %v222 = vld [vmem:[%s171 + $0x50] sm:$0xf]
        %v223 = vld [vmem:[%s171 + $0x54] sm:$0xf]
        %v224 = vld [vmem:[%s171 + $0x58] sm:$0xf]
        %v225 = vld [vmem:[%s171 + $0x5c] sm:$0xf]
        %v226 = vld [vmem:[%s171 + $0x60] sm:$0xf]
        %v227 = vld [vmem:[%s171 + $0x64] sm:$0xf]
        %v228 = vld [vmem:[%s171 + $0x68] sm:$0xf]
        %v229 = vld [vmem:[%s171 + $0x6c] sm:$0xf]
        %v230 = vld [vmem:[%s171 + $0x70] sm:$0xf]
        %v231 = vld [vmem:[%s171 + $0x74] sm:$0xf]
        %v232 = vld [vmem:[%s171 + $0x78] sm:$0xf]
        %v233 = vld [vmem:[%s171 + $0x7c] sm:$0xf]
        %v234 = vld [vmem:[#allocation5] sm:$0xf]
        %v235 = vld [vmem:[#allocation5 + $0x4] sm:$0xf]
        %v236 = vld [vmem:[#allocation5 + $0x8] sm:$0xf]
        %v237 = vld [vmem:[#allocation5 + $0xc] sm:$0xf]
        %v238 = vld [vmem:[#allocation5 + $0x10] sm:$0xf]
        %v239 = vld [vmem:[#allocation5 + $0x14] sm:$0xf]
        %v240 = vld [vmem:[#allocation5 + $0x18] sm:$0xf]
        %v241 = vld [vmem:[#allocation5 + $0x1c] sm:$0xf]
        %v242 = vld [vmem:[#allocation5 + $0x20] sm:$0xf]
        %v243 = vld [vmem:[#allocation5 + $0x24] sm:$0xf]
        %v244 = vld [vmem:[#allocation5 + $0x28] sm:$0xf]
        %v245 = vld [vmem:[#allocation5 + $0x2c] sm:$0xf]
        %v246 = vld [vmem:[#allocation5 + $0x30] sm:$0xf]
        %v247 = vld [vmem:[#allocation5 + $0x34] sm:$0xf]
        %v248 = vld [vmem:[#allocation5 + $0x38] sm:$0xf]
        %v249 = vld [vmem:[#allocation5 + $0x3c] sm:$0xf]
        %v282 = vunpack.c.l.b16 %v202
        %v283 = vunpack.c.l.b16 %v203
        %v284 = vunpack.c.l.b16 %v204
        %v285 = vunpack.c.l.b16 %v205
        %v286 = vunpack.c.l.b16 %v206
        %v287 = vunpack.c.l.b16 %v207
        %v288 = vunpack.c.l.b16 %v208
        %v289 = vunpack.c.l.b16 %v209
        %v290 = vunpack.c.l.b16 %v210
        %v291 = vunpack.c.l.b16 %v211
        %v292 = vunpack.c.l.b16 %v212
        %v293 = vunpack.c.l.b16 %v213
        %v294 = vunpack.c.l.b16 %v214
        %v295 = vunpack.c.l.b16 %v215
        %v296 = vunpack.c.l.b16 %v216
        %v297 = vunpack.c.l.b16 %v217
        %v298 = vunpack.c.l.b16 %v218
        %v299 = vunpack.c.l.b16 %v219
        %v300 = vunpack.c.l.b16 %v220
        %v301 = vunpack.c.l.b16 %v221
        %v302 = vunpack.c.l.b16 %v222
        %v303 = vunpack.c.l.b16 %v223
        %v304 = vunpack.c.l.b16 %v224
        %v305 = vunpack.c.l.b16 %v225
        %v306 = vunpack.c.l.b16 %v226
        %v307 = vunpack.c.l.b16 %v227
        %v308 = vunpack.c.l.b16 %v228
        %v309 = vunpack.c.l.b16 %v229
        %v310 = vunpack.c.l.b16 %v230
        %v311 = vunpack.c.l.b16 %v231
        %v312 = vunpack.c.l.b16 %v232
        %v313 = vunpack.c.l.b16 %v233
        %v314 = vpack.c.b16 %v283, %v282
        %v315 = vpack.c.b16 %v285, %v284
        %v316 = vpack.c.b16 %v287, %v286
        %v317 = vpack.c.b16 %v289, %v288
        %v318 = vpack.c.b16 %v291, %v290
        %v319 = vpack.c.b16 %v293, %v292
        %v320 = vpack.c.b16 %v295, %v294
        %v321 = vpack.c.b16 %v297, %v296
        %v322 = vpack.c.b16 %v299, %v298
        %v323 = vpack.c.b16 %v301, %v300
        %v324 = vpack.c.b16 %v303, %v302
        %v325 = vpack.c.b16 %v305, %v304
        %v326 = vpack.c.b16 %v307, %v306
        %v327 = vpack.c.b16 %v309, %v308
        %v328 = vpack.c.b16 %v311, %v310
        %v329 = vpack.c.b16 %v313, %v312
        %v362 = vunpack.c.l.b16 %v234
        %v363 = vunpack.c.l.b16 %v235
        %v364 = vunpack.c.l.b16 %v236
        %v365 = vunpack.c.l.b16 %v237
        %v366 = vunpack.c.l.b16 %v238
        %v367 = vunpack.c.l.b16 %v239
        %v368 = vunpack.c.l.b16 %v240
        %v369 = vunpack.c.l.b16 %v241
        %v370 = vunpack.c.l.b16 %v242
        %v371 = vunpack.c.l.b16 %v243
        %v372 = vunpack.c.l.b16 %v244
        %v373 = vunpack.c.l.b16 %v245
        %v374 = vunpack.c.l.b16 %v246
        %v375 = vunpack.c.l.b16 %v247
        %v376 = vunpack.c.l.b16 %v248
        %v377 = vunpack.c.l.b16 %v249
        %v378 = vpack.c.b16 %v363, %v362
        %v379 = vpack.c.b16 %v365, %v364
        %v380 = vpack.c.b16 %v367, %v366
        %v381 = vpack.c.b16 %v369, %v368
        %v382 = vpack.c.b16 %v371, %v370
        %v383 = vpack.c.b16 %v373, %v372
        %v384 = vpack.c.b16 %v375, %v374
        %v385 = vpack.c.b16 %v377, %v376
        %394 = vmatpush.bf16.msra.mxu0 %v385
        %395 = vmatpush.bf16.msra.mxu0 %v384
        %396 = vmatpush.bf16.msra.mxu0 %v383
        %397 = vmatpush.bf16.msra.mxu0 %v382
        %398 = vmatpush.bf16.msra.mxu0 %v381
        %399 = vmatpush.bf16.msra.mxu0 %v380
        %400 = vmatpush.bf16.msra.mxu0 %v379
        %401 = vmatpush.bf16.msra.mxu0 %v378
        %402 = vmatmul.bf16.gmra.mxu0 %v314
        %v403 = vpop.f32.mrf.mxu0
        %v404 = vadd.f32 0.0, %v403
        %v405 = vpop.f32.mrf.mxu0
        %v406 = vadd.f32 0.0, %v405
        %407 = vmatmul.bf16.gmra.mxu0 %v315
        %v408 = vpop.f32.mrf.mxu0
        %v409 = vadd.f32 0.0, %v408
        %v410 = vpop.f32.mrf.mxu0
        %v411 = vadd.f32 0.0, %v410
        %412 = vmatmul.bf16.gmra.mxu0 %v316
        %v413 = vpop.f32.mrf.mxu0
        %v414 = vadd.f32 0.0, %v413
        %v415 = vpop.f32.mrf.mxu0
        %v416 = vadd.f32 0.0, %v415
        %417 = vmatmul.bf16.gmra.mxu0 %v317
        %v418 = vpop.f32.mrf.mxu0
        %v419 = vadd.f32 0.0, %v418
        %v420 = vpop.f32.mrf.mxu0
        %v421 = vadd.f32 0.0, %v420
        %422 = vmatmul.bf16.gmra.mxu0 %v318
        %v423 = vpop.f32.mrf.mxu0
        %v424 = vadd.f32 0.0, %v423
        %v425 = vpop.f32.mrf.mxu0
        %v426 = vadd.f32 0.0, %v425
        %427 = vmatmul.bf16.gmra.mxu0 %v319
        %v428 = vpop.f32.mrf.mxu0
        %v429 = vadd.f32 0.0, %v428
        %v430 = vpop.f32.mrf.mxu0
        %v431 = vadd.f32 0.0, %v430
        %432 = vmatmul.bf16.gmra.mxu0 %v320
        %v433 = vpop.f32.mrf.mxu0
        %v434 = vadd.f32 0.0, %v433
        %v435 = vpop.f32.mrf.mxu0
        %v436 = vadd.f32 0.0, %v435
        %437 = vmatmul.bf16.gmra.mxu0 %v321
        %v438 = vpop.f32.mrf.mxu0
        %v439 = vadd.f32 0.0, %v438
        %v440 = vpop.f32.mrf.mxu0
        %v441 = vadd.f32 0.0, %v440
        %442 = vmatmul.bf16.gmra.mxu0 %v322
        %v443 = vpop.f32.mrf.mxu0
        %v444 = vadd.f32 0.0, %v443
        %v445 = vpop.f32.mrf.mxu0
        %v446 = vadd.f32 0.0, %v445
        %447 = vmatmul.bf16.gmra.mxu0 %v323
        %v448 = vpop.f32.mrf.mxu0
        %v449 = vadd.f32 0.0, %v448
        %v450 = vpop.f32.mrf.mxu0
        %v451 = vadd.f32 0.0, %v450
        %452 = vmatmul.bf16.gmra.mxu0 %v324
        %v453 = vpop.f32.mrf.mxu0
        %v454 = vadd.f32 0.0, %v453
        %v455 = vpop.f32.mrf.mxu0
        %v456 = vadd.f32 0.0, %v455
        %457 = vmatmul.bf16.gmra.mxu0 %v325
        %v458 = vpop.f32.mrf.mxu0
        %v459 = vadd.f32 0.0, %v458
        %v460 = vpop.f32.mrf.mxu0
        %v461 = vadd.f32 0.0, %v460
        %462 = vmatmul.bf16.gmra.mxu0 %v326
        %v463 = vpop.f32.mrf.mxu0
        %v464 = vadd.f32 0.0, %v463
        %v465 = vpop.f32.mrf.mxu0
        %v466 = vadd.f32 0.0, %v465
        %467 = vmatmul.bf16.gmra.mxu0 %v327
        %v468 = vpop.f32.mrf.mxu0
        %v469 = vadd.f32 0.0, %v468
        %v470 = vpop.f32.mrf.mxu0
        %v471 = vadd.f32 0.0, %v470
        %472 = vmatmul.bf16.gmra.mxu0 %v328
        %v473 = vpop.f32.mrf.mxu0
        %v474 = vadd.f32 0.0, %v473
        %v475 = vpop.f32.mrf.mxu0
        %v476 = vadd.f32 0.0, %v475
        %477 = vmatmul.bf16.gmra.mxu0 %v329
        %v478 = vpop.f32.mrf.mxu0
        %v479 = vadd.f32 0.0, %v478
        %v480 = vpop.f32.mrf.mxu0
        %v481 = vadd.f32 0.0, %v480
        %482 = vdwg.mxu0
        %v483 = vld [vmem:[#allocation7] sm:$0x1]
        %v484 = vadd.f32 %v404, %v406
        %v485 = vadd.f32 %v484, %v409
        %v486 = vadd.f32 %v485, %v411
        %v487 = vadd.f32 %v486, %v414
        %v488 = vadd.f32 %v487, %v416
        %v489 = vadd.f32 %v488, %v419
        %v490 = vadd.f32 %v489, %v421
        %v491 = vadd.f32 %v490, %v424
        %v492 = vadd.f32 %v491, %v426
        %v493 = vadd.f32 %v492, %v429
        %v494 = vadd.f32 %v493, %v431
        %v495 = vadd.f32 %v494, %v434
        %v496 = vadd.f32 %v495, %v436
        %v497 = vadd.f32 %v496, %v439
        %v498 = vadd.f32 %v497, %v441
        %v499 = vadd.f32 %v498, %v444
        %v500 = vadd.f32 %v499, %v446
        %v501 = vadd.f32 %v500, %v449
        %v502 = vadd.f32 %v501, %v451
        %v503 = vadd.f32 %v502, %v454
        %v504 = vadd.f32 %v503, %v456
        %v505 = vadd.f32 %v504, %v459
        %v506 = vadd.f32 %v505, %v461
        %v507 = vadd.f32 %v506, %v464
        %v508 = vadd.f32 %v507, %v466
        %v509 = vadd.f32 %v508, %v469
        %v510 = vadd.f32 %v509, %v471
        %v511 = vadd.f32 %v510, %v474
        %v512 = vadd.f32 %v511, %v476
        %v513 = vadd.f32 %v512, %v479
        %v514 = vadd.f32 %v513, %v481
        %v515 = vrot.slane %v514, 4
        %v516 = vadd.f32 %v514, %v515
        %v517 = vrot.slane %v516, 2
        %v518 = vadd.f32 %v516, %v517
        %v519 = vrot.slane %v518, 1
        %v520 = vadd.f32 %v518, %v519
        %v521 = vadd.f32 %v483, %v520
        %522 = vst [vmem:[#allocation7] sm:$0x1] %v521
        %v523 = vld [vmem:[#allocation8] sm:$0x1]
        %v524 = vmul.f32 %v404, %v404
        %v525 = vmul.f32 %v406, %v406
        %v526 = vmul.f32 %v409, %v409
        %v527 = vmul.f32 %v411, %v411
        %v528 = vmul.f32 %v414, %v414
        %v529 = vmul.f32 %v416, %v416
        %v530 = vmul.f32 %v419, %v419
        %v531 = vmul.f32 %v421, %v421
        %v532 = vmul.f32 %v424, %v424
        %v533 = vmul.f32 %v426, %v426
        %v534 = vmul.f32 %v429, %v429
        %v535 = vmul.f32 %v431, %v431
        %v536 = vmul.f32 %v434, %v434
        %v537 = vmul.f32 %v436, %v436
        %v538 = vmul.f32 %v439, %v439
        %v539 = vmul.f32 %v441, %v441
        %v540 = vmul.f32 %v444, %v444
        %v541 = vmul.f32 %v446, %v446
        %v542 = vmul.f32 %v449, %v449
        %v543 = vmul.f32 %v451, %v451
        %v544 = vmul.f32 %v454, %v454
        %v545 = vmul.f32 %v456, %v456
        %v546 = vmul.f32 %v459, %v459
        %v547 = vmul.f32 %v461, %v461
        %v548 = vmul.f32 %v464, %v464
        %v549 = vmul.f32 %v466, %v466
        %v550 = vmul.f32 %v469, %v469
        %v551 = vmul.f32 %v471, %v471
        %v552 = vmul.f32 %v474, %v474
        %v553 = vmul.f32 %v476, %v476
        %v554 = vmul.f32 %v479, %v479
        %v555 = vmul.f32 %v481, %v481
        %v556 = vadd.f32 %v524, %v525
        %v557 = vadd.f32 %v556, %v526
        %v558 = vadd.f32 %v557, %v527
        %v559 = vadd.f32 %v558, %v528
        %v560 = vadd.f32 %v559, %v529
        %v561 = vadd.f32 %v560, %v530
        %v562 = vadd.f32 %v561, %v531
        %v563 = vadd.f32 %v562, %v532
        %v564 = vadd.f32 %v563, %v533
        %v565 = vadd.f32 %v564, %v534
        %v566 = vadd.f32 %v565, %v535
        %v567 = vadd.f32 %v566, %v536
        %v568 = vadd.f32 %v567, %v537
        %v569 = vadd.f32 %v568, %v538
        %v570 = vadd.f32 %v569, %v539
        %v571 = vadd.f32 %v570, %v540
        %v572 = vadd.f32 %v571, %v541
        %v573 = vadd.f32 %v572, %v542
        %v574 = vadd.f32 %v573, %v543
        %v575 = vadd.f32 %v574, %v544
        %v576 = vadd.f32 %v575, %v545
        %v577 = vadd.f32 %v576, %v546
        %v578 = vadd.f32 %v577, %v547
        %v579 = vadd.f32 %v578, %v548
        %v580 = vadd.f32 %v579, %v549
        %v581 = vadd.f32 %v580, %v550
        %v582 = vadd.f32 %v581, %v551
        %v583 = vadd.f32 %v582, %v552
        %v584 = vadd.f32 %v583, %v553
        %v585 = vadd.f32 %v584, %v554
        %v586 = vadd.f32 %v585, %v555
        %v587 = vrot.slane %v586, 4
        %v588 = vadd.f32 %v586, %v587
        %v589 = vrot.slane %v588, 2
        %v590 = vadd.f32 %v588, %v589
        %v591 = vrot.slane %v590, 1
        %v592 = vadd.f32 %v590, %v591
        %v593 = vadd.f32 %v523, %v592
        %594 = vst [vmem:[#allocation8] sm:$0x1] %v593
        // Predicated region
        $region41: #{tpu_custom_call.1} parent=27 // pred_check
          %p595 = pneg %p81
        $region42: #{tpu_custom_call.1} parent=27 // pred_check_branch
          %597 = sbr.rel (%p595) target = $region44
        $region43: #{tpu_custom_call.1} parent=27 // pred_region
          %599 = vsyncadd [#allocation4], 0
          %s601 = sshll.u32 [#allocation7], 4
          %s602 = int_to_ptr.vmem [resolvable:$true] %s601
          %s603 = sshll.u32 %s2, 4
          %s604 = int_to_ptr.hbm [resolvable:$true] %s603
          %606 = dma.vmem_to_hbm [thread:$0]  %s602, 16, %s604, [#allocation4]
        $region44: #{tpu_custom_call.1} parent=27 // pred_fallthru
          _
        // Predicated region
        $region45: #{tpu_custom_call.1} parent=27 // pred_check
          %p607 = pneg %p102
        $region46: #{tpu_custom_call.1} parent=27 // pred_check_branch
          %609 = sbr.rel (%p607) target = $region48
        $region47: #{tpu_custom_call.1} parent=27 // pred_region
          %611 = vsyncadd [#allocation9], 0
          %s613 = sshll.u32 [#allocation8], 4
          %s614 = int_to_ptr.vmem [resolvable:$true] %s613
          %s615 = sshll.u32 %s3, 4
          %s616 = int_to_ptr.hbm [resolvable:$true] %s615
          %618 = dma.vmem_to_hbm [thread:$0]  %s614, 16, %s616, [#allocation9]
        $region48: #{tpu_custom_call.1} parent=27 // pred_fallthru
          _
        // Predicated region
        $region49: #{tpu_custom_call.1} parent=27 // pred_check
          %p619 = pneg %p81
        $region50: #{tpu_custom_call.1} parent=27 // pred_check_branch
          %621 = sbr.rel (%p619) target = $region52
        $region51: #{tpu_custom_call.1} parent=27 // pred_region
          %623 = dma.done [#allocation4], 16
        $region52: #{tpu_custom_call.1} parent=27 // pred_fallthru
          _
        // Predicated region
        $region53: #{tpu_custom_call.1} parent=27 // pred_check
          %p624 = pneg %p102
        $region54: #{tpu_custom_call.1} parent=27 // pred_check_branch
          %626 = sbr.rel (%p624) target = $region56
        $region55: #{tpu_custom_call.1} parent=27 // pred_region
          %628 = dma.done [#allocation9], 16
        $region56: #{tpu_custom_call.1} parent=27 // pred_fallthru
          _
      $region28: #{tpu_custom_call.1} parent=5 // pred_fallthru
        _
      %p629 = scmp.le.s32.totalorder 2, %s16
      // Predicated region
      $region57: #{tpu_custom_call.1} parent=5 // pred_check
        %p630 = pneg %p629
      $region58: #{tpu_custom_call.1} parent=5 // pred_check_branch
        %632 = sbr.rel (%p630) target = $region60
      $region59: #{tpu_custom_call.1} parent=5 // pred_region
        %s633 = ssub.s32 %s16, 2
      $region60: #{tpu_custom_call.1} parent=5 // pred_fallthru
        _
    $region6: #{tpu_custom_call.1} parent=1 // loop_footer
      %s20 = sadd.s32 1, %s16
    $region7: #{tpu_custom_call.1} parent=1 // loop_footer_branch
      %15 = sbr.rel target = $region3
    $region8: #{tpu_custom_call.1} parent=1 // loop_exit
      _
    %634 = vsyncpa [#allocation3], 1
    %s635 = scalar_lea.sflag [#allocation3], 1
    %636 = vsyncpa %s635, 1
    %637 = vsyncpa [#allocation6], 1
    %638 = vsyncpa [#allocation4], 1
    %s639 = scalar_lea.sflag [#allocation4], 1
    %640 = vsyncpa %s639, 1
    %641 = vsyncpa [#allocation9], 1

</llo_original>
